<compile_context>
chip_gen: v6e
topology: v6e:2x2x1
jax: 0.10.0
libtpu: 0.0.40
codegen_flags: <defaults>
</compile_context>

<pallas_src>
import functools

import jax
import jax.numpy as jnp
from jax.experimental import pallas as pl
from jax.experimental.pallas import tpu as pltpu


def _round_up(x, m):
    return ((x + m - 1) // m) * m


def _vmem_capacity_bytes():
    """Physical VMEM capacity of the attached TPU; conservative fallback."""
    try:
        info = pltpu.get_tpu_info()
        v = getattr(info, "vmem_capacity_bytes", None)
        if v:
            return int(v)
    except Exception:
        pass
    return 64 * 1024 * 1024  # v7x per-TensorCore VMEM — the smallest generation


def _num_tensorcores():
    """TensorCores per chip (1 on v5e/v6e, 2 on v7x); conservative fallback 1."""
    try:
        info = pltpu.get_tpu_info()
        for name in ("num_cores", "core_count", "num_tensorcores",
                     "tensorcore_count"):
            v = getattr(info, name, None)
            if v:
                return int(v)
    except Exception:
        pass
    try:
        return max(1, int(getattr(jax.devices()[0], "num_cores", 1)))
    except Exception:
        return 1


def _mlm_loss_kernel(logits_ref, target_ref, nll_ref, ent_ref, *,
                     n_valid, tm, tiles_per_core, compute_entropy):
    p = pl.program_id(0)   # per-TensorCore partial (core-parallel split)
    i = pl.program_id(1)   # sequential row-tile index within this partial

    @pl.when(i == 0)
    def _():
        nll_ref[...] = jnp.zeros_like(nll_ref)
        ent_ref[...] = jnp.zeros_like(ent_ref)

    logits = logits_ref[...]                                   # (TM, C) native dtype
    c = logits.shape[-1]
    tgt = target_ref[...]                                      # (TM, 1) int32

    # Log-sum-exp / log-softmax with a single exp pass over the class axis.
    # Row max in the input dtype (max is exact in bf16); promote once for
    # exp and the f32 sums.
    m = jnp.max(logits, axis=-1, keepdims=True).astype(jnp.float32)   # (TM, 1)
    x = logits.astype(jnp.float32) - m                                 # (TM, C)
    e = jnp.exp(x)                                                     # (TM, C)
    denom = jnp.sum(e, axis=-1, keepdims=True)                         # (TM, 1)
    log_denom = jnp.log(denom)                                         # (TM, 1)

    # True-class shifted logit via one-hot select (no dynamic gather on TPU).
    # (1, C) iota broadcasts against the (TM, 1) target column — no (TM, C)
    # int32 temporary.
    col = jax.lax.broadcasted_iota(jnp.int32, (1, c), 1)
    x_true = jnp.sum(jnp.where(col == tgt, x, 0.0),
                     axis=-1, keepdims=True)                           # (TM, 1)
    nll_row = log_denom - x_true                                       # lse - logit_true

    # Mask rows past the true row count (partial edge blocks / duplicated
    # tiles from an uneven core split).  jnp.where (not multiply) so
    # garbage/NaN rows cannot poison the accumulator.
    t = p * tiles_per_core + i                                         # logical tile idx
    row = t * tm + jax.lax.broadcasted_iota(jnp.int32, (tm, 1), 0)
    valid = row < n_valid

    nll_ref[...] = nll_ref[...] + jnp.sum(jnp.where(valid, nll_row, 0.0))

    if compute_entropy:
        # H(row) = log(denom) - sum(e * x) / denom.  The per-row divide goes
        # through pl.reciprocal (EUP slot); exact so we match the f32
        # reference to 1e-5 — flip approx=True when tolerance allows.
        inv_denom = pl.reciprocal(denom, approx=False)
        ent_row = log_denom - jnp.sum(e * x, axis=-1, keepdims=True) * inv_denom
        ent_ref[...] = ent_ref[...] + jnp.sum(jnp.where(valid, ent_row, 0.0))


def mlm_loss(logits, target, scale_factor=1.0, entropy_reg=False,
             entropy_weight=0.1, tm=None, num_partials=None):
    """Pallas implementation of MLMLoss.forward.

    logits: (B, S, C) float; target: (B, S) int.  Returns a scalar float32 loss.
    """
    b, s, c = logits.shape
    n = b * s
    logits_flat = logits.reshape(n, c)            # keep dtype, no padding copy
    target_flat = target.reshape(n, 1).astype(jnp.int32)
    itemsize = logits_flat.dtype.itemsize

    # Native sublane multiple for the logits dtype (8 f32, 16 bf16, 32 int8).
    sublane = max(8, 32 // max(itemsize, 1))

    # --- Generation-aware tile sizing ------------------------------------
    vmem_cap = _vmem_capacity_bytes()
    budget = vmem_cap // 2                      # working-set budget (~50% cap)

    if tm is None:
        # Target a 4 MiB logits block (2-8 MiB = measured HBM-roofline sweet
        # spot), clamped by a VMEM budget that counts the pipeline buffers
        # plus the f32 working-set temporaries (x, e, one-hot select, e*x).
        target_block_bytes = 4 << 20
        tm_bw = target_block_bytes // max(c * itemsize, 1)
        per_row_vmem = 2 * c * itemsize + 4 * c * 4
        tm_vmem = budget // max(per_row_vmem, 1)
        tm = min(tm_bw, tm_vmem)
    tm = int(max(sublane, min(int(tm), _round_up(n, sublane))))
    tm = (tm // sublane) * sublane

    n_tiles = int(pl.cdiv(n, tm))

    # --- Core split (only when the chip actually has multiple TensorCores) -
    if num_partials is None:
        num_partials = _num_tensorcores()
    num_partials = max(1, min(int(num_partials), n_tiles))
    tiles_per_core = int(pl.cdiv(n_tiles, num_partials))

    def in_map(p, i):
        # Clamp so an over-count tile (uneven split) re-reads the last real
        # tile; its logical rows are >= n and fully masked in-kernel.
        return (jnp.minimum(p * tiles_per_core + i, n_tiles - 1), 0)

    kernel = functools.partial(
        _mlm_loss_kernel, n_valid=n, tm=tm,
        tiles_per_core=tiles_per_core, compute_entropy=bool(entropy_reg))

    # --- Buffering / VMEM limit -------------------------------------------
    block_bytes = tm * c * itemsize
    use_triple = (block_bytes < (2 << 20)) and (tiles_per_core >= 4)
    n_buffers = 3 if use_triple else 2

    logits_spec = pl.BlockSpec((tm, c), in_map)
    if use_triple:
        try:
            logits_spec = pl.BlockSpec((tm, c), in_map,
                                       pipeline_mode=pl.Buffered(3))
        except TypeError:   # older BlockSpec without pipeline_mode
            logits_spec = pl.BlockSpec((tm, c), in_map)

    temp_bytes = 4 * tm * c * 4                 # f32 x, e, select, e*x
    vmem_needed = n_buffers * block_bytes + temp_bytes + (2 << 20)
    vmem_limit = None
    if vmem_needed > 12 * 1024 * 1024:          # below every generation's default
        vmem_limit = int(min(max(int(vmem_needed * 1.25), 16 << 20),
                             int(vmem_cap * 0.85)))

    # Only CORE_PARALLEL actually shards a grid axis across TensorCores.
    ARBITRARY = getattr(pltpu, "ARBITRARY", "arbitrary")
    CORE_PARALLEL = getattr(pltpu, "CORE_PARALLEL", "parallel")
    lead_sem = CORE_PARALLEL if num_partials > 1 else ARBITRARY

    nll_part, ent_part = pl.pallas_call(
        kernel,
        out_shape=(jax.ShapeDtypeStruct((num_partials, 1, 1), jnp.float32),
                   jax.ShapeDtypeStruct((num_partials, 1, 1), jnp.float32)),
        grid_spec=pltpu.PrefetchScalarGridSpec(
            num_scalar_prefetch=0,
            grid=(num_partials, tiles_per_core),
            in_specs=[
                logits_spec,
                pl.BlockSpec((tm, 1), in_map),
            ],
            out_specs=(
                pl.BlockSpec((1, 1, 1), lambda p, i: (p, 0, 0)),
                pl.BlockSpec((1, 1, 1), lambda p, i: (p, 0, 0)),
            ),
        ),
        compiler_params=pltpu.CompilerParams(
            dimension_semantics=(lead_sem, ARBITRARY),
            vmem_limit_bytes=vmem_limit),
    )(logits_flat, target_flat)

    inv_n = 1.0 / n
    loss = (jnp.sum(nll_part) * inv_n) * scale_factor
    if entropy_reg:
        loss = loss + entropy_weight * (jnp.sum(ent_part) * inv_n)
    return loss


def _mlm_loss_ref(logits, target, scale_factor=1.0, entropy_reg=False,
                  entropy_weight=0.1):
    """Pure-JAX reference mirroring the PyTorch module."""
    b, s, c = logits.shape
    lf = logits.reshape(-1, c).astype(jnp.float32)
    tf = target.reshape(-1).astype(jnp.int32)
    probs = jax.nn.softmax(lf, axis=-1)
    true_p = jnp.take_along_axis(probs, tf[:, None], axis=-1)[:, 0]
    loss = -jnp.mean(jnp.log(true_p)) * scale_factor
    if entropy_reg:
        entropy = jnp.mean(-jnp.sum(probs * jnp.log(probs + 1e-8), axis=-1))
        loss = loss + entropy_weight * entropy
    return loss


if __name__ == "__main__":
    # Small shapes consistent with the module: (batch=2, seq=8, num_classes=32).
    B, S, C = 2, 8, 32
    key = jax.random.PRNGKey(0)
    k_logits, k_target = jax.random.split(key)
    logits = jax.random.normal(k_logits, (B, S, C), dtype=jnp.float32)
    target = jax.random.randint(k_target, (B, S), 0, C, dtype=jnp.int32)

    # Plain NLL path.
    out = mlm_loss(logits, target, scale_factor=1.0)
    out = jax.block_until_ready(out)
    ref = _mlm_loss_ref(logits, target, scale_factor=1.0)
    assert jnp.allclose(out, ref, rtol=1e-5, atol=1e-5), (out, ref)

    # Entropy-regularized path with a non-trivial scale factor.
    out2 = mlm_loss(logits, target, scale_factor=0.5, entropy_reg=True,
                    entropy_weight=0.1)
    out2 = jax.block_until_ready(out2)
    ref2 = _mlm_loss_ref(logits, target, scale_factor=0.5, entropy_reg=True,
                         entropy_weight=0.1)
    assert jnp.allclose(out2, ref2, rtol=1e-5, atol=1e-5), (out2, ref2)

    print("KERNEL_OK")
</pallas_src>

<mosaic_0001>
module attributes {stable_mosaic.version = 11 : i64} {
  func.func @_mlm_loss_kernel(%arg0: i32, %arg1: i32, %arg2: memref<16x32xf32, #tpu.memory_space<vmem>>, %arg3: memref<16x1xi32, #tpu.memory_space<vmem>>, %arg4: memref<1x1x1xf32, #tpu.memory_space<vmem>>, %arg5: memref<1x1x1xf32, #tpu.memory_space<vmem>>) attributes {dimension_semantics = [#tpu.dimension_semantics<arbitrary>, #tpu.dimension_semantics<arbitrary>], iteration_bounds = array<i64: 1, 1>, scalar_prefetch = 0 : i64, scratch_operands = 0 : i64, tpu.core_type = #tpu.core_type<tc>, window_params = [{transform_indices = @transform_0, window_bounds = array<i64: 16, 32>}, {transform_indices = @transform_1, window_bounds = array<i64: 16, 1>}, {transform_indices = @transform_2, window_bounds = array<i64: 1, 1, 1>}, {transform_indices = @transform_3, window_bounds = array<i64: 1, 1, 1>}]} {
    %c0_i32 = arith.constant 0 : i32
    %0 = arith.cmpi eq, %arg1, %c0_i32 : i32
    %1 = arith.extui %0 : i1 to i32
    %c0_i32_0 = arith.constant 0 : i32
    %2 = arith.cmpi ne, %1, %c0_i32_0 : i32
    scf.if %2 {
      %cst_16 = arith.constant 0.000000e+00 : f32
      %40 = vector.broadcast %cst_16 : f32 to vector<1x1x1xf32>
      %c0_17 = arith.constant 0 : index
      %c0_18 = arith.constant 0 : index
      %c0_19 = arith.constant 0 : index
      %41 = vector.load %arg4[%c0_17, %c0_18, %c0_19] : memref<1x1x1xf32, #tpu.memory_space<vmem>>, vector<1x1x1xf32>
      tpu.vector_store %arg4[%c0_17, %c0_18, %c0_19], %40 {strides = array<i32>} : memref<1x1x1xf32, #tpu.memory_space<vmem>>, vector<1x1x1xf32>,
      %cst_20 = arith.constant 0.000000e+00 : f32
      %42 = vector.broadcast %cst_20 : f32 to vector<1x1x1xf32>
      %c0_21 = arith.constant 0 : index
      %c0_22 = arith.constant 0 : index
      %c0_23 = arith.constant 0 : index
      %43 = vector.load %arg5[%c0_21, %c0_22, %c0_23] : memref<1x1x1xf32, #tpu.memory_space<vmem>>, vector<1x1x1xf32>
      tpu.vector_store %arg5[%c0_21, %c0_22, %c0_23], %42 {strides = array<i32>} : memref<1x1x1xf32, #tpu.memory_space<vmem>>, vector<1x1x1xf32>,
    } else {
    }
    %c0 = arith.constant 0 : index
    %c0_1 = arith.constant 0 : index
    %3 = vector.load %arg2[%c0, %c0_1] : memref<16x32xf32, #tpu.memory_space<vmem>>, vector<16x32xf32>
    %c0_2 = arith.constant 0 : index
    %c0_3 = arith.constant 0 : index
    %4 = vector.load %arg3[%c0_2, %c0_3] : memref<16x1xi32, #tpu.memory_space<vmem>>, vector<16x1xi32>
    %cst = arith.constant dense<0xFF800000> : vector<16xf32>
    %5 = vector.multi_reduction <maximumf>, %3, %cst [1] : vector<16x32xf32> to vector<16xf32>
    %6 = vector.shape_cast %5 : vector<16xf32> to vector<16x1xf32>
    %7 = vector.broadcast %6 : vector<16x1xf32> to vector<16x32xf32>
    %8 = arith.subf %3, %7 : vector<16x32xf32>
    %9 = math.exp %8 : vector<16x32xf32>
    %cst_4 = arith.constant dense<0.000000e+00> : vector<16xf32>
    %10 = vector.multi_reduction <add>, %9, %cst_4 [1] : vector<16x32xf32> to vector<16xf32>
    %11 = vector.shape_cast %10 : vector<16xf32> to vector<16x1xf32>
    %12 = math.log %11 : vector<16x1xf32>
    %13 = tpu.iota {dimensions = array<i32: 1>} : vector<1x32xi32>
    %14 = vector.broadcast %13 : vector<1x32xi32> to vector<16x32xi32>
    %15 = vector.broadcast %4 : vector<16x1xi32> to vector<16x32xi32>
    %16 = arith.cmpi eq, %14, %15 : vector<16x32xi32>
    %cst_5 = arith.constant 0.000000e+00 : f32
    %17 = vector.broadcast %cst_5 : f32 to vector<16x32xf32>
    %18 = arith.select %16, %8, %17 : vector<16x32xi1>, vector<16x32xf32>
    %cst_6 = arith.constant dense<0.000000e+00> : vector<16xf32>
    %19 = vector.multi_reduction <add>, %18, %cst_6 [1] : vector<16x32xf32> to vector<16xf32>
    %20 = vector.shape_cast %19 : vector<16xf32> to vector<16x1xf32>
    %21 = arith.subf %12, %20 : vector<16x1xf32>
    %c1_i32 = arith.constant 1 : i32
    %22 = arith.muli %arg0, %c1_i32 : i32
    %23 = arith.addi %22, %arg1 : i32
    %c16_i32 = arith.constant 16 : i32
    %24 = arith.muli %23, %c16_i32 : i32
    %25 = tpu.iota {dimensions = array<i32: 0>} : vector<16x1xi32>
    %26 = vector.broadcast %24 : i32 to vector<16x1xi32>
    %27 = arith.addi %26, %25 : vector<16x1xi32>
    %c16_i32_7 = arith.constant 16 : i32
    %28 = vector.broadcast %c16_i32_7 : i32 to vector<16x1xi32>
    %29 = arith.cmpi slt, %27, %28 : vector<16x1xi32>
    %c0_8 = arith.constant 0 : index
    %c0_9 = arith.constant 0 : index
    %c0_10 = arith.constant 0 : index
    %30 = vector.load %arg4[%c0_8, %c0_9, %c0_10] : memref<1x1x1xf32, #tpu.memory_space<vmem>>, vector<1x1x1xf32>
    %cst_11 = arith.constant 0.000000e+00 : f32
    %31 = vector.broadcast %cst_11 : f32 to vector<16x1xf32>
    %32 = arith.select %29, %21, %31 : vector<16x1xi1>, vector<16x1xf32>
    %33 = vector.shape_cast %32 : vector<16x1xf32> to vector<1x16x1xf32>
    %cst_12 = arith.constant dense<0.000000e+00> : vector<1xf32>
    %34 = vector.multi_reduction <add>, %33, %cst_12 [1, 2] : vector<1x16x1xf32> to vector<1xf32>
    %35 = vector.shape_cast %34 : vector<1xf32> to vector<1x1x1xf32>
    %36 = vector.extract %35[0, 0, 0] : f32 from vector<1x1x1xf32>
    %37 = vector.broadcast %36 : f32 to vector<1x1x1xf32>
    %38 = arith.addf %30, %37 : vector<1x1x1xf32>
    %c0_13 = arith.constant 0 : index
    %c0_14 = arith.constant 0 : index
    %c0_15 = arith.constant 0 : index
    %39 = vector.load %arg4[%c0_13, %c0_14, %c0_15] : memref<1x1x1xf32, #tpu.memory_space<vmem>>, vector<1x1x1xf32>
    tpu.vector_store %arg4[%c0_13, %c0_14, %c0_15], %38 {strides = array<i32>} : memref<1x1x1xf32, #tpu.memory_space<vmem>>, vector<1x1x1xf32>,
    return
  }
  func.func @transform_0(%arg0: i32, %arg1: i32) -> (i32, i32) {
    %c1_i32 = arith.constant 1 : i32
    %0 = arith.muli %arg0, %c1_i32 : i32
    %1 = arith.addi %0, %arg1 : i32
    %c0_i32 = arith.constant 0 : i32
    %2 = arith.minsi %1, %c0_i32 : i32
    %c0_i32_0 = arith.constant 0 : i32
    %c0_i32_1 = arith.constant 0 : i32
    return %2, %c0_i32_0 : i32, i32
  }
  func.func @transform_1(%arg0: i32, %arg1: i32) -> (i32, i32) {
    %c1_i32 = arith.constant 1 : i32
    %0 = arith.muli %arg0, %c1_i32 : i32
    %1 = arith.addi %0, %arg1 : i32
    %c0_i32 = arith.constant 0 : i32
    %2 = arith.minsi %1, %c0_i32 : i32
    %c0_i32_0 = arith.constant 0 : i32
    %c0_i32_1 = arith.constant 0 : i32
    return %2, %c0_i32_0 : i32, i32
  }
  func.func @transform_2(%arg0: i32, %arg1: i32) -> (i32, i32, i32) {
    %c0_i32 = arith.constant 0 : i32
    %c0_i32_0 = arith.constant 0 : i32
    %c0_i32_1 = arith.constant 0 : i32
    return %arg0, %c0_i32, %c0_i32_0 : i32, i32, i32
  }
  func.func @transform_3(%arg0: i32, %arg1: i32) -> (i32, i32, i32) {
    %c0_i32 = arith.constant 0 : i32
    %c0_i32_0 = arith.constant 0 : i32
    %c0_i32_1 = arith.constant 0 : i32
    return %arg0, %c0_i32, %c0_i32_0 : i32, i32, i32
  }
}

</mosaic_0001>

<llo_original>
// kernel: tpu_custom_call.1
$region0: #{tpu_custom_call.1}
  #allocation0 [shape = 'u32[]', space=smem, size = 0x4, offset = 0x4, fixed_abs, tag = 'smem constant byte address 0x4 - core index']
  #allocation1 [shape = 'u32[144,128]{1,0:T(1,128)}', space=vmem, size = 0x12000, scoped, tag = 'internal scratch']
  %s0 = inlined_call_operand.vmem [shape: f32[16,32], index: 0, kind: input, shape index: {}]
  %s1 = inlined_call_operand.vmem [shape: s32[16,1], index: 1, kind: input, shape index: {}]
  %s2 = inlined_call_operand.hbm [shape: f32[1,1,1], index: 2, kind: output, shape index: {0}]
  %s3 = inlined_call_operand.hbm [shape: f32[1,1,1], index: 3, kind: output, shape index: {1}]
  %4 = xla_tuple %s2, %s3
  %s5 = sld [smem:[#allocation0]]
  $region30: #{tpu_custom_call.1} parent=0
    _
  %s7 = ssub.s32 1, %s5
  %s8 = scalar_select 0, %s7, %s5
  $region1: #{tpu_custom_call.1} parent=0
    #allocation2 [shape = 'u8[512]{0}', space=vmem, size = 0x400, scoped, tag = 'output window, operand 0, single buffered']
    #allocation3 [shape = 's32[1]{0}', space=sflag, size = 0x4, scoped, tag = 'scoped memory for tpu_custom_call.1']
    #allocation4 [shape = 'u8[512]{0}', space=vmem, size = 0x400, scoped, tag = 'output window, operand 1, single buffered']
    #allocation5 [shape = 's32[1]{0}', space=sflag, size = 0x4, scoped, tag = 'scoped memory for tpu_custom_call.1']
    %9 = vsyncpa [#allocation3], 0
    %10 = vsyncpa [#allocation5], 0
    // Predicated region
    $region2: #{tpu_custom_call.1} parent=1 // pred_check
      _
    $region3: #{tpu_custom_call.1} parent=1 // pred_check_branch
      %12 = sbr.rel (0) target = $region5
    $region4: #{tpu_custom_call.1} parent=1 // pred_region
      %s13 = sadd.s32 0, 0
      %p14 = scmp.lt.s32.totalorder %s13, 0
      %s15 = scalar_select %p14, %s13, 0
      %s16 = smul.u32 2, %s15
      %p17 = scmp.lt.s32.totalorder %s16, 1
      %s18 = scalar_select %p17, %s16, 1
      %s19 = smul.addr %s18, 8
      %s20 = scalar_lea.vmem %s0, %s19
      %s21 = sadd.s32 0, 0
      %p22 = scmp.lt.s32.totalorder %s21, 0
      %s23 = scalar_select %p22, %s21, 0
      %s24 = smul.u32 2, %s23
    $region5: #{tpu_custom_call.1} parent=1 // pred_fallthru
      _
    // Predicated region
    $region6: #{tpu_custom_call.1} parent=1 // pred_check
      _
    $region7: #{tpu_custom_call.1} parent=1 // pred_check_branch
      %26 = sbr.rel (0) target = $region9
    $region8: #{tpu_custom_call.1} parent=1 // pred_region
      %s27 = sadd.s32 0, 0
      %p28 = scmp.lt.s32.totalorder %s27, 0
      %s29 = scalar_select %p28, %s27, 0
      %s30 = smul.u32 2, %s29
      %p31 = scmp.lt.s32.totalorder %s30, 1
      %s32 = scalar_select %p31, %s30, 1
      %s33 = smul.addr %s32, 8
      %s34 = scalar_lea.vmem %s1, %s33
      %s35 = sadd.s32 0, 0
      %p36 = scmp.lt.s32.totalorder %s35, 0
      %s37 = scalar_select %p36, %s35, 0
      %s38 = smul.u32 2, %s37
    $region9: #{tpu_custom_call.1} parent=1 // pred_fallthru
      _
    %s39 = sadd.s32 0, 0
    %p40 = scmp.lt.s32.totalorder %s39, 0
    %s41 = scalar_select %p40, %s39, 0
    %s42 = smul.u32 2, %s41
    %p43 = scmp.lt.s32.totalorder %s42, 1
    %s44 = scalar_select %p43, %s42, 1
    %s45 = smul.addr %s44, 8
    %s46 = scalar_lea.vmem %s0, %s45
    %s47 = sadd.s32 0, 0
    %p48 = scmp.lt.s32.totalorder %s47, 0
    %s49 = scalar_select %p48, %s47, 0
    %s50 = smul.u32 2, %s49
    %p51 = scmp.lt.s32.totalorder %s50, 1
    %s52 = scalar_select %p51, %s50, 1
    %s53 = smul.addr %s52, 8
    %s54 = scalar_lea.vmem %s1, %s53
    %s55 = sadd.s32 0, 0
    %p56 = scmp.lt.s32.totalorder %s55, 0
    %s57 = scalar_select %p56, %s55, 0
    %s58 = smul.u32 2, %s57
    %p59 = scmp.lt.s32.totalorder %s58, 1
    %s60 = scalar_select %p59, %s58, 1
    %s61 = smul.addr %s60, 8
    %s62 = scalar_lea.vmem %s0, %s61
    %s63 = sadd.s32 0, 0
    %p64 = scmp.lt.s32.totalorder %s63, 0
    %s65 = scalar_select %p64, %s63, 0
    %s66 = smul.u32 2, %s65
    %s67 = sadd.s32 0, 0
    %p68 = scmp.lt.s32.totalorder %s67, 0
    %s69 = scalar_select %p68, %s67, 0
    %s70 = smul.u32 2, %s69
    %p71 = scmp.lt.s32.totalorder %s70, 1
    %s72 = scalar_select %p71, %s70, 1
    %s73 = smul.addr %s72, 8
    %s74 = scalar_lea.vmem %s1, %s73
    %s75 = sadd.s32 0, 0
    %p76 = scmp.lt.s32.totalorder %s75, 0
    %s77 = scalar_select %p76, %s75, 0
    %s78 = smul.u32 2, %s77
    %p79 = scmp.eq.s32.totalorder 0, 0
    // Predicated region
    $region10: #{tpu_custom_call.1} parent=1 // pred_check
      %p80 = pneg %p79
    $region11: #{tpu_custom_call.1} parent=1 // pred_check_branch
      %82 = sbr.rel (%p80) target = $region13
    $region12: #{tpu_custom_call.1} parent=1 // pred_region
      %vm83 = vcmask 0
      %84 = vst.msk [vmem:[#allocation2] sm:$0x1] %vm83, 0.0
      %85 = vst.msk [vmem:[#allocation4] sm:$0x1] %vm83, 0.0
    $region13: #{tpu_custom_call.1} parent=1 // pred_fallthru
      _
    %v86 = vld [vmem:[%s62] sm:$0xff]
    %v87 = vld [vmem:[%s62 + $0x8] sm:$0xff]
    %v88 = vld [vmem:[%s74] sm:$0xff]
    %v89 = vld [vmem:[%s74 + $0x8] sm:$0xff]
    %vm90 = vcmask 261120
    %v91 = vsel %vm90, %v86, -inf
    %92 = vmax.xlane.f32.xlu0 %v91
    %v93 = vpop.xlane.xlu0 %92
    %v94 = vsel %vm90, %v87, -inf
    %95 = vmax.xlane.f32.xlu0 %v94
    %v96 = vpop.xlane.xlu0 %95
    %v97 = vsub.f32 %v86, %v93
    %v98 = vsub.f32 %v87, %v96
    %v99 = vmul.f32 %v97, 1.442695
    %v100 = vpow.pop %v99
    %v101 = vmul.f32 %v98, 1.442695
    %v102 = vpow.pop %v101
    %v103 = vsel %vm90, %v100, 0.0
    %104 = vadd.xlane.f32.xlu0 %v103
    %v105 = vpop.xlane.xlu0 %104
    %v106 = vsel %vm90, %v102, 0.0
    %107 = vadd.xlane.f32.xlu0 %v106
    %v108 = vpop.xlane.xlu0 %107
    %v109 = vlog2.pop %v105
    %v110 = vmul.f32 %v109, 0.6931472
    %v111 = vlog2.pop %v108
    %v112 = vmul.f32 %v111, 0.6931472
    %v113 = vlaneseq
    %v114 = vand.u32 %v113, 127
    %115 = vset.pattern.permute.xlu0 0
    %116 = vperm.xlu0 %115, %v88
    %v117 = vpop.permute.xlu0 %116
    %118 = vset.pattern.permute.xlu0 0
    %119 = vperm.xlu0 %118, %v89
    %v120 = vpop.permute.xlu0 %119
    %vm121 = vcmp.eq.s32.totalorder %v114, %v117
    %vm122 = vcmp.eq.s32.totalorder %v114, %v120
    %v123 = vsel %vm121, %v97, 0.0
    %v124 = vsel %vm122, %v98, 0.0
    %v125 = vsel %vm90, %v123, 0.0
    %126 = vadd.xlane.f32.xlu0 %v125
    %v127 = vpop.xlane.xlu0 %126
    %v128 = vsel %vm90, %v124, 0.0
    %129 = vadd.xlane.f32.xlu0 %v128
    %v130 = vpop.xlane.xlu0 %129
    %v131 = vsub.f32 %v110, %v127
    %v132 = vsub.f32 %v112, %v130
    %s133 = sadd.s32 0, 0
    %s134 = smul.u32 %s133, 16
    %v135 = vlaneseq
    %v136 = vshrl.u32 %v135, 7
    %v137 = vadd.s32 %v136, 8
    %v138 = vstv %s134
    %v139 = vadd.s32 %v138, %v136
    %v140 = vadd.s32 %v138, %v137
    %vm141 = vcmp.lt.s32.totalorder %v139, 16
    %vm142 = vcmp.lt.s32.totalorder %v140, 16
    %v143 = vld [vmem:[#allocation2] sm:$0x1]
    %v144 = vsel %vm141, %v131, 0.0
    %v145 = vsel %vm142, %v132, 0.0
    %vm146 = vcmask 7168
    %v147 = vsel %vm146, %v144, 0.0
    %v148 = vsel %vm146, %v145, 0.0
    %v149 = vadd.f32 %v147, %v148
    %150 = vadd.xlane.f32.xlu0 %v149
    %v151 = vpop.xlane.xlu0 %150
    %v152 = vrot.slane %v151, 4
    %v153 = vadd.f32 %v151, %v152
    %v154 = vrot.slane %v153, 2
    %v155 = vadd.f32 %v153, %v154
    %v156 = vrot.slane %v155, 1
    %v157 = vadd.f32 %v155, %v156
    %s158 = vtos %v157
    %v159 = vstv %s158
    %v160 = vadd.f32 %v143, %v159
    %vm161 = vcmask 0
    %162 = vst.msk [vmem:[#allocation2] sm:$0x1] %vm161, %v160
    // Predicated region
    $region14: #{tpu_custom_call.1} parent=1 // pred_check
      _
    $region15: #{tpu_custom_call.1} parent=1 // pred_check_branch
      %164 = sbr.rel (0) target = $region17
    $region16: #{tpu_custom_call.1} parent=1 // pred_region
      %s166 = ssub.s32 16, 16
      %167 = vsyncadd [#allocation3], %s166
      %s169 = sshll.u32 [#allocation2], 4
      %s170 = int_to_ptr.vmem [resolvable:$true] %s169
      %172 = dma.vmem_to_hbm [thread:$0]  %s170, 16, %s2, [#allocation3]
    $region17: #{tpu_custom_call.1} parent=1 // pred_fallthru
      _
    // Predicated region
    $region18: #{tpu_custom_call.1} parent=1 // pred_check
      _
    $region19: #{tpu_custom_call.1} parent=1 // pred_check_branch
      %174 = sbr.rel (0) target = $region21
    $region20: #{tpu_custom_call.1} parent=1 // pred_region
      %s176 = ssub.s32 16, 16
      %177 = vsyncadd [#allocation5], %s176
      %s179 = sshll.u32 [#allocation4], 4
      %s180 = int_to_ptr.vmem [resolvable:$true] %s179
      %182 = dma.vmem_to_hbm [thread:$0]  %s180, 16, %s3, [#allocation5]
    $region21: #{tpu_custom_call.1} parent=1 // pred_fallthru
      _
    // Predicated region
    $region22: #{tpu_custom_call.1} parent=1 // pred_check
      _
    $region23: #{tpu_custom_call.1} parent=1 // pred_check_branch
      %184 = sbr.rel (0) target = $region25
    $region24: #{tpu_custom_call.1} parent=1 // pred_region
      %185 = dma.done [#allocation3], 16
    $region25: #{tpu_custom_call.1} parent=1 // pred_fallthru
      _
    // Predicated region
    $region26: #{tpu_custom_call.1} parent=1 // pred_check
      _
    $region27: #{tpu_custom_call.1} parent=1 // pred_check_branch
      %187 = sbr.rel (0) target = $region29
    $region28: #{tpu_custom_call.1} parent=1 // pred_region
      %188 = dma.done [#allocation5], 16
    $region29: #{tpu_custom_call.1} parent=1 // pred_fallthru
      _
    %189 = vsyncpa [#allocation3], 1
    %190 = vsyncpa [#allocation5], 1

</llo_original>
